<compile_context>
chip_gen: v5e
topology: v5e:2x2
jax: 0.10.0
libtpu: 0.0.40
codegen_flags: <defaults>
</compile_context>

<pallas_src>
import functools

import jax
import jax.numpy as jnp
from jax.experimental import pallas as pl
from jax.experimental.pallas import tpu as pltpu

_MIB = 1024 * 1024


def _ceil_div(a: int, b: int) -> int:
    return -(-a // b)


def _round_up(x: int, m: int) -> int:
    return _ceil_div(x, m) * m


def _sublane_pack(itemsize: int) -> int:
    # rows per fully packed sublane group: 8 (f32), 16 (bf16), 32 (int8)
    return max(8, 32 // max(1, itemsize))


def _vmem_budget_bytes() -> int:
    """Usable VMEM budget, derived from the actual chip when possible."""
    cap = 0
    try:
        cap = int(getattr(pltpu.get_tpu_info(), "vmem_capacity_bytes", 0))
    except Exception:
        cap = 0
    if cap <= 0:
        cap = 64 * _MIB  # v7x physical VMEM = smallest across v5e/v6e/v7x
    return int(cap * 0.7)  # headroom for compiler-internal scratch


def _use_core_parallel() -> bool:
    """Only v7-class chips expose 2 TensorCores per Pallas device today."""
    if not hasattr(pltpu, "CORE_PARALLEL"):
        return False
    try:
        kind = jax.devices()[0].device_kind.lower()
    except Exception:
        return False
    return "v7" in kind


def _dim_semantics(core_parallel: bool, *rest: str):
    """Row (batch) axis semantics + the remaining axes, as pltpu enums."""
    row = pltpu.CORE_PARALLEL if core_parallel else pltpu.PARALLEL
    table = {"parallel": pltpu.PARALLEL, "arbitrary": pltpu.ARBITRARY}
    return (row,) + tuple(table[r] for r in rest)


# ---------------------------------------------------------------------------
# Kernels
# ---------------------------------------------------------------------------
def _normalize_kernel(x_ref, o_ref):
    """Single pass: the whole audio row lives in the lane axis of the block.

    Bulk math stays in the input dtype; only the (bm, 1) max / reciprocal is
    f32.  Ragged batch edge blocks rely on Pallas masking the writeback of the
    out-of-range rows (rows are independent, so garbage rows are never used).
    """
    x = x_ref[...]                                                   # (bm, L)
    max_abs = jnp.max(jnp.abs(x), axis=1, keepdims=True).astype(jnp.float32)
    inv = 1.0 / (max_abs + 1e-10)                                    # (bm, 1)
    o_ref[...] = (x * inv.astype(x.dtype)).astype(o_ref.dtype)


def _absmax_inv_kernel(x_ref, inv_ref, acc_ref, *, valid_len, l_tile, ragged):
    """Two-pass pass 1: per-row abs-max over L tiles, emitted as 1/(max+eps).

    A lane-dense (bm, 128) running max is kept in VMEM scratch so the inner
    loop is pure vld + vmax (no cross-lane XLU reduce, no 1-lane masked store
    per step).  The cross-lane reduce, the reciprocal and the (bm, 1) store
    happen once on the last L tile, and the ragged-L mask is applied only
    there.
    """
    l = pl.program_id(1)
    last = pl.num_programs(1) - 1

    @pl.when(l == 0)
    def _():
        acc_ref[...] = jnp.zeros_like(acc_ref)     # |x| >= 0 -> 0 is identity

    def _accumulate(mask_tail: bool):
        a = jnp.abs(x_ref[...])                                  # (bm, tl)
        if mask_tail:
            # Mask out-of-range lanes of the ragged last L tile (padded lanes
            # may contain garbage, including NaN).
            lane = jax.lax.broadcasted_iota(jnp.int32, a.shape, 1) + l * l_tile
            a = jnp.where(lane < valid_len, a, jnp.zeros_like(a))
        # Fold lane-blocks of 128: elementwise vmax across vregs, no XLU.
        m = jnp.max(a.reshape(a.shape[0], -1, 128), axis=1)      # (bm, 128)
        acc_ref[...] = jnp.maximum(acc_ref[...], m.astype(jnp.float32))

    if ragged:
        @pl.when(l != last)
        def _():
            _accumulate(False)

        @pl.when(l == last)
        def _():
            _accumulate(True)
    else:
        _accumulate(False)

    @pl.when(l == last)
    def _():
        row_max = jnp.max(acc_ref[...], axis=1, keepdims=True)   # one XLU reduce
        inv_ref[...] = 1.0 / (row_max + 1e-10)                   # (bm, 1) f32


def _scale_kernel(x_ref, inv_ref, o_ref):
    """Two-pass pass 2: pure load-mul-store with the precomputed 1/(max+eps)."""
    inv = inv_ref[...].astype(x_ref.dtype)                       # (bm, 1)
    o_ref[...] = (x_ref[...] * inv).astype(o_ref.dtype)


# ---------------------------------------------------------------------------
# Wrapper
# ---------------------------------------------------------------------------
def normalize(audio: jax.Array, *, two_pass: bool | None = None,
              l_tile: int | None = None,
              core_parallel: bool | None = None) -> jax.Array:
    """Scale each row of a [batch, audio_length] array to be within [-1, 1]."""
    if audio.ndim != 2:
        raise ValueError("Audio should be 2D: [batch_size X audio_length]")
    B, L = audio.shape
    if L < 1:
        raise ValueError("Audio length is zero")

    itemsize = jnp.dtype(audio.dtype).itemsize
    pack = _sublane_pack(itemsize)
    budget = _vmem_budget_bytes()
    if core_parallel is None:
        core_parallel = _use_core_parallel()

    # Block-size cap: 128 MiB-VMEM chips (v5e/v6e) take ~16 MiB blocks; 64 MiB
    # chips (v7x) stay at ~4 MiB.
    big_vmem = budget >= 80 * _MIB
    target_block = min(16 * _MIB if big_vmem else 4 * _MIB, budget // 6)
    target_block = max(target_block, pack * 128 * itemsize)
    cparams = dict(vmem_limit_bytes=int(budget))

    row_bytes = L * itemsize
    if two_pass is None:
        # Single pass needs (in + out) double-buffered (>= pack, L) blocks.
        # Factor 6 (not 4) leaves headroom for compiler temporaries so narrow
        # dtypes can't tip v7x's 64 MiB VMEM over the scoped limit.
        two_pass = 6 * pack * row_bytes > budget

    # ----------------------- single-pass path ------------------------------
    if not two_pass:
        if B <= pack:
            bm = B                          # full-dim row block (any B allowed)
        else:
            # Cap: rows fitting the target block.  Floor: >= ~512 KiB / block.
            # Steps: aim for ~8 grid steps so the pipeline reaches steady state
            # (and both v7x TensorCores get several blocks each).
            bm_cap = max(pack, (target_block // row_bytes) // pack * pack)
            bm_floor = _round_up(max(1, _ceil_div(512 * 1024, row_bytes)), pack)
            bm_steps = _round_up(max(1, _ceil_div(B, 8)), pack)
            bm = min(bm_cap, max(bm_floor, bm_steps))
            if bm >= B:
                bm = B                      # tiny input: one full-dim block

        return pl.pallas_call(
            _normalize_kernel,
            out_shape=jax.ShapeDtypeStruct((B, L), audio.dtype),
            grid=(pl.cdiv(B, bm),),
            in_specs=[pl.BlockSpec((bm, L), lambda i: (i, 0))],
            out_specs=pl.BlockSpec((bm, L), lambda i: (i, 0)),
            compiler_params=pltpu.CompilerParams(
                dimension_semantics=_dim_semantics(core_parallel), **cparams),
            cost_estimate=pl.CostEstimate(
                flops=3 * B * L, transcendentals=0,
                bytes_accessed=2 * B * L * itemsize),
        )(audio)

    # ----------------------- two-pass (L-tiled) path ------------------------
    # Row tile.
    bm = min(B, 8 * pack)
    if bm < B:
        bm = max(pack, (bm // pack) * pack)
    # else bm == B -> full-dim row block (exempt from the 8-divisibility rule)

    # Lane tile: multiple of 128, >= 1024 lanes (128-wide tiles run ~3x off
    # the HBM roofline), capped so (bm, l_tile) blocks fit the VMEM target.
    auto_tile = max(1024, (target_block // max(1, bm * itemsize)) // 128 * 128)
    if l_tile is None:
        l_tile = auto_tile
    else:
        l_tile = max(1024, _round_up(int(l_tile), 128))
        l_tile = min(l_tile, auto_tile)
    l_tile = min(l_tile, _round_up(L, 128))

    nb = pl.cdiv(B, bm)
    nl = pl.cdiv(L, l_tile)
    ragged = (L % l_tile) != 0

    # TODO(synk): for v7x workloads just above the single-pass threshold, fuse
    # both passes into one pallas_call (row-block outer grid, inner
    # emit_pipeline over L: max sweep then scale sweep) to drop the second
    # launch, the second pipeline ramp, and the (B, 1) HBM round trip.

    # Pass 1: per-row abs-max -> inv (reduction axis last, accumulator+output
    # resident across it).
    reduce_kernel = functools.partial(
        _absmax_inv_kernel, valid_len=L, l_tile=l_tile, ragged=ragged)
    inv = pl.pallas_call(
        reduce_kernel,
        out_shape=jax.ShapeDtypeStruct((B, 1), jnp.float32),
        grid=(nb, nl),
        in_specs=[pl.BlockSpec((bm, l_tile), lambda i, l: (i, l))],
        out_specs=pl.BlockSpec((bm, 1), lambda i, l: (i, 0)),
        scratch_shapes=[pltpu.VMEM((bm, 128), jnp.float32)],
        compiler_params=pltpu.CompilerParams(
            dimension_semantics=_dim_semantics(core_parallel, "arbitrary"),
            **cparams),
        cost_estimate=pl.CostEstimate(
            flops=2 * B * L, transcendentals=0,
            bytes_accessed=B * L * itemsize + 4 * B),
    )(audio)

    # Pass 2: fully parallel load-mul-store.
    return pl.pallas_call(
        _scale_kernel,
        out_shape=jax.ShapeDtypeStruct((B, L), audio.dtype),
        grid=(nb, nl),
        in_specs=[pl.BlockSpec((bm, l_tile), lambda i, l: (i, l)),
                  pl.BlockSpec((bm, 1), lambda i, l: (i, 0))],
        out_specs=pl.BlockSpec((bm, l_tile), lambda i, l: (i, l)),
        compiler_params=pltpu.CompilerParams(
            dimension_semantics=_dim_semantics(core_parallel, "parallel"),
            **cparams),
        cost_estimate=pl.CostEstimate(
            flops=B * L, transcendentals=0,
            bytes_accessed=2 * B * L * itemsize + 4 * B),
    )(audio, inv)


# ---------------------------------------------------------------------------
# Self-test
# ---------------------------------------------------------------------------
if __name__ == "__main__":
    key = jax.random.PRNGKey(0)
    k1, k2, k3 = jax.random.split(key, 3)

    def ref_normalize(a):
        m = jnp.max(jnp.abs(a), axis=1, keepdims=True)
        return a / (m + 1e-10)

    # 1) Small clip -> single-pass path (matches the original module's shapes).
    a1 = jax.random.normal(k1, (2, 256), dtype=jnp.float32) * 3.0
    r1 = normalize(a1)
    jax.block_until_ready(r1)
    assert r1.shape == a1.shape
    assert jnp.allclose(r1, ref_normalize(a1), atol=1e-6), "mismatch (single-pass)"
    assert jnp.all(jnp.abs(r1) <= 1.0 + 1e-6)

    # 2) Batch that is not a sublane multiple, single-pass path.
    a2 = jax.random.normal(k2, (20, 384), dtype=jnp.float32) * 5.0
    r2 = normalize(a2)
    jax.block_until_ready(r2)
    assert jnp.allclose(r2, ref_normalize(a2), atol=1e-6), "mismatch (ragged batch)"

    # 3) Forced two-pass path: several L tiles plus a ragged last L tile,
    #    exercising the lane-dense accumulator and the gated tail mask/finalize.
    a3 = jax.random.normal(k3, (3, 5000), dtype=jnp.float32) * 7.0
    r3 = normalize(a3, two_pass=True, l_tile=1024)
    jax.block_until_ready(r3)
    assert jnp.allclose(r3, ref_normalize(a3), atol=1e-6), "mismatch (two-pass)"

    print("KERNEL_OK")
</pallas_src>

<mosaic_0001>
module attributes {stable_mosaic.version = 11 : i64} {
  func.func @_normalize_kernel(%arg0: i32, %arg1: memref<2x256xf32, #tpu.memory_space<vmem>>, %arg2: memref<2x256xf32, #tpu.memory_space<vmem>>) attributes {dimension_semantics = [#tpu.dimension_semantics<parallel>], iteration_bounds = array<i64: 1>, scalar_prefetch = 0 : i64, scratch_operands = 0 : i64, tpu.core_type = #tpu.core_type<tc>, window_params = [{transform_indices = @transform_0, window_bounds = array<i64: 2, 256>}, {transform_indices = @transform_1, window_bounds = array<i64: 2, 256>}]} {
    %c0 = arith.constant 0 : index
    %c0_0 = arith.constant 0 : index
    %0 = vector.load %arg1[%c0, %c0_0] : memref<2x256xf32, #tpu.memory_space<vmem>>, vector<2x256xf32>
    %1 = math.absf %0 : vector<2x256xf32>
    %cst = arith.constant dense<0xFF800000> : vector<2xf32>
    %2 = vector.multi_reduction <maximumf>, %1, %cst [1] : vector<2x256xf32> to vector<2xf32>
    %3 = vector.shape_cast %2 : vector<2xf32> to vector<2x1xf32>
    %cst_1 = arith.constant 1.000000e-10 : f32
    %4 = vector.broadcast %cst_1 : f32 to vector<2x1xf32>
    %5 = arith.addf %3, %4 : vector<2x1xf32>
    %cst_2 = arith.constant 1.000000e+00 : f32
    %6 = vector.broadcast %cst_2 : f32 to vector<2x1xf32>
    %7 = arith.divf %6, %5 : vector<2x1xf32>
    %8 = vector.broadcast %7 : vector<2x1xf32> to vector<2x256xf32>
    %9 = arith.mulf %0, %8 : vector<2x256xf32>
    %c0_3 = arith.constant 0 : index
    %c0_4 = arith.constant 0 : index
    %10 = vector.load %arg2[%c0_3, %c0_4] : memref<2x256xf32, #tpu.memory_space<vmem>>, vector<2x256xf32>
    tpu.vector_store %arg2[%c0_3, %c0_4], %9 {strides = array<i32>} : memref<2x256xf32, #tpu.memory_space<vmem>>, vector<2x256xf32>,
    return
  }
  func.func @transform_0(%arg0: i32) -> (i32, i32) {
    %c0_i32 = arith.constant 0 : i32
    %c0_i32_0 = arith.constant 0 : i32
    return %arg0, %c0_i32 : i32, i32
  }
  func.func @transform_1(%arg0: i32) -> (i32, i32) {
    %c0_i32 = arith.constant 0 : i32
    %c0_i32_0 = arith.constant 0 : i32
    return %arg0, %c0_i32 : i32, i32
  }
}

</mosaic_0001>

<llo_original>
// kernel: tpu_custom_call.1
$region0: #{tpu_custom_call.1}
  #allocation0 [shape = 'u32[]', space=smem, size = 0x4, offset = 0x4, fixed_abs, tag = 'smem constant byte address 0x4 - core index']
  #allocation1 [shape = 'u32[72,128]{1,0:T(1,128)}', space=vmem, size = 0x9000, scoped, tag = 'internal scratch']
  %s0 = inlined_call_operand.hbm [shape: f32[2,256], index: 0, kind: input, shape index: {}]
  %s1 = inlined_call_operand.hbm [shape: f32[2,256], index: 1, kind: output, shape index: {}]
  %s2 = sld [smem:[#allocation0]]
  $region18: #{tpu_custom_call.1} parent=0
    _
  %s4 = ssub.s32 1, %s2
  %s5 = scalar_select 0, %s4, %s2
  $region1: #{tpu_custom_call.1} parent=0
    #allocation2 [shape = 'u8[2048]{0}', space=vmem, size = 0x800, scoped, tag = 'input window, operand 0, single buffered']
    #allocation3 [shape = 's32[1]{0}', space=sflag, size = 0x4, scoped, tag = 'scoped memory for tpu_custom_call.1']
    #allocation4 [shape = 's32[1]{0}', space=sflag, size = 0x4, scoped, tag = 'scoped memory for tpu_custom_call.1']
    #allocation5 [shape = 'u8[2048]{0}', space=vmem, size = 0x800, scoped, tag = 'output window, operand 0, single buffered']
    %6 = vsyncpa [#allocation3], 0
    %7 = vsyncpa [#allocation4], 0
    // Predicated region
    $region2: #{tpu_custom_call.1} parent=1 // pred_check
      _
    $region3: #{tpu_custom_call.1} parent=1 // pred_check_branch
      %9 = sbr.rel (0) target = $region5
    $region4: #{tpu_custom_call.1} parent=1 // pred_region
      %11 = vsyncadd [#allocation3], 0
      %s13 = sshll.u32 %s0, 4
      %s14 = int_to_ptr.hbm [resolvable:$true] %s13
      %s15 = sshll.u32 [#allocation2], 4
      %s16 = int_to_ptr.vmem [resolvable:$true] %s15
      %18 = dma.hbm_to_vmem [thread:$0]  %s14, 64, %s16, [#allocation3]
    $region5: #{tpu_custom_call.1} parent=1 // pred_fallthru
      _
    // Predicated region
    $region6: #{tpu_custom_call.1} parent=1 // pred_check
      _
    $region7: #{tpu_custom_call.1} parent=1 // pred_check_branch
      %20 = sbr.rel (0) target = $region9
    $region8: #{tpu_custom_call.1} parent=1 // pred_region
      %22 = dma.done [#allocation3], 64
    $region9: #{tpu_custom_call.1} parent=1 // pred_fallthru
      _
    %v23 = vld [vmem:[#allocation2] sm:$0xf]
    %v24 = vand.u32 2147483647, %v23
    %26 = vst [vmem:[#allocation1] ss:$4 sm:$0xff] %v24
    %v27 = vld.sshfl [vmem:[#allocation1] sm:$0xff pattern:$0x73625140]
    %v28 = vld.sshfl [vmem:[#allocation1 + $0x8] sm:$0xff pattern:$0x73625140]
    %vm31 = vcmask 1041408
    %v32 = vsel %vm31, %v27, -inf
    %v33 = vsel %vm31, %v28, -inf
    %v34 = vmax.f32 %v32, %v33
    %35 = vmax.xlane.f32.xlu0 %v34
    %v36 = vpop.xlane.xlu0 %35
    %v37 = vadd.f32 %v36, 1e-10
    %v38 = vrcp.pop %v37
    %v39 = vmul.f32 %v37, %v38
    %v40 = vsub.f32 1.0, %v39
    %v41 = vmul.f32 %v38, %v40
    %v42 = vadd.f32 %v38, %v41
    %vm43 = vweird.f32 %v37
    %vm44 = vweird.f32 %v38
    %vm45 = vmor %vm43, %vm44
    %v46 = vsel %vm45, %v38, %v42
    %v47 = vand.u32 2147483647, %v37
    %vm48 = vcmp.eq.f32.partialorder %v47, 8.507059e+37
    %v49 = vand.u32 %v37, 2147483648
    %v50 = vor.u32 1.1754944e-38, %v49
    %v51 = vsel %vm48, %v50, %v46
    %v52 = vmul.f32 1.0, %v51
    %v55 = vunpack.c.l.s4 269488144
    %v56 = vunpack.c.0.s8 %v55
    %v57 = vperm.slane %v52, %v56
    %v59 = vmul.f32 %v23, %v57
    %60 = vst [vmem:[#allocation5] sm:$0xf] %v59
    // Predicated region
    $region10: #{tpu_custom_call.1} parent=1 // pred_check
      _
    $region11: #{tpu_custom_call.1} parent=1 // pred_check_branch
      %62 = sbr.rel (0) target = $region13
    $region12: #{tpu_custom_call.1} parent=1 // pred_region
      %64 = vsyncadd [#allocation4], 0
      %s66 = sshll.u32 [#allocation5], 4
      %s67 = int_to_ptr.vmem [resolvable:$true] %s66
      %s68 = sshll.u32 %s1, 4
      %s69 = int_to_ptr.hbm [resolvable:$true] %s68
      %71 = dma.vmem_to_hbm [thread:$0]  %s67, 64, %s69, [#allocation4]
    $region13: #{tpu_custom_call.1} parent=1 // pred_fallthru
      _
    // Predicated region
    $region14: #{tpu_custom_call.1} parent=1 // pred_check
      _
    $region15: #{tpu_custom_call.1} parent=1 // pred_check_branch
      %73 = sbr.rel (0) target = $region17
    $region16: #{tpu_custom_call.1} parent=1 // pred_region
      %75 = dma.done [#allocation4], 64
    $region17: #{tpu_custom_call.1} parent=1 // pred_fallthru
      _
    %76 = vsyncpa [#allocation3], 1
    %77 = vsyncpa [#allocation4], 1

</llo_original>
